<compile_context>
chip_gen: v7x
topology: tpu7x:2x2x1
jax: 0.10.0
libtpu: 0.0.40
codegen_flags: <defaults>
</compile_context>

<pallas_src>
import jax
import jax.numpy as jnp
from jax.experimental import pallas as pl
from jax.experimental.pallas import tpu as pltpu


def _valuenet_kernel(x_ref, w1_ref, b1_ref, w2_ref, b2_ref, o_ref):
    # x_ref : (state_dim, TB)    one batch tile, batch on the lane axis
    # w1_ref: (hidden, state_dim) resident fc1 weight (PyTorch layout, no .T needed)
    # b1_ref: (hidden, 1)         resident fc1 bias column
    # w2_ref: (hidden, 1)         resident fc2 weight column
    # b2_ref: (1,) in SMEM        fc2 bias scalar
    # o_ref : (1, TB)             value^T for this batch tile (lane-dense)
    xt = x_ref[...]
    w1 = w1_ref[...]
    b1 = b1_ref[...]
    w2 = w2_ref[...]
    b2 = b2_ref[0]

    # fc1 + ReLU, computed transposed: h^T = relu(W1 @ x^T + b1)
    h = jnp.dot(w1, xt, preferred_element_type=jnp.float32) + b1    # (hidden, TB)
    h = jnp.maximum(h, 0.0)

    # fc2 (output width 1): VPU multiply + sublane reduce, keeps batch on lanes.
    out = jnp.sum(h * w2, axis=0, keepdims=True) + b2               # (1, TB)
    o_ref[...] = out.astype(o_ref.dtype)


def value_net_forward(x, w1, b1, w2, b2, *, tb_max=2048):
    """PPO ValueNet forward.  x: (B, state_dim) f32 -> (B, 1) f32."""
    B, state_dim = x.shape
    hidden = w1.shape[0]

    # Batch tile: multiple of 128 (lane width), capped at tb_max.
    tb = min(tb_max, pl.cdiv(B, 128) * 128)
    b_pad = pl.cdiv(B, tb) * tb

    # Wrapper-side layout plumbing: transpose x (batch -> lanes), pad batch to
    # a tile multiple, reshape biases / fc2 weight to columns, b2 to a scalar.
    x_t = jnp.zeros((state_dim, b_pad), x.dtype).at[:, :B].set(x.T)
    b1_col = b1.reshape(hidden, 1)
    w2_col = w2.reshape(hidden, 1)   # torch stores fc2.weight as (1, hidden)
    b2_s = b2.reshape(1)

    grid = (b_pad // tb,)

    out_t = pl.pallas_call(
        _valuenet_kernel,
        out_shape=jax.ShapeDtypeStruct((1, b_pad), jnp.float32),
        grid=grid,
        in_specs=[
            pl.BlockSpec((state_dim, tb), lambda i: (0, i)),      # x^T tiled on batch
            pl.BlockSpec((hidden, state_dim), lambda i: (0, 0)),  # w1 resident
            pl.BlockSpec((hidden, 1), lambda i: (0, 0)),          # b1 resident
            pl.BlockSpec((hidden, 1), lambda i: (0, 0)),          # w2 resident
            pl.BlockSpec(memory_space=pltpu.MemorySpace.SMEM),    # b2 scalar in SMEM
        ],
        out_specs=pl.BlockSpec((1, tb), lambda i: (0, i)),
        compiler_params=pltpu.CompilerParams(
            dimension_semantics=("parallel",),    # batch tiles are independent
            vmem_limit_bytes=32 * 1024 * 1024,    # safe on v5e/v6e/v7x for these tiles
        ),
    )(x_t, w1, b1_col, w2_col, b2_s)

    return out_t[:, :B].T                         # (B, 1)


def init_params(key, state_dim, hidden_dim):
    """Deterministic PyTorch-Linear-style init: U(-1/sqrt(fan_in), 1/sqrt(fan_in))."""
    k1, k2, k3, k4 = jax.random.split(key, 4)
    lim1 = 1.0 / jnp.sqrt(jnp.float32(state_dim))
    lim2 = 1.0 / jnp.sqrt(jnp.float32(hidden_dim))
    w1 = jax.random.uniform(k1, (hidden_dim, state_dim), jnp.float32, -lim1, lim1)
    b1 = jax.random.uniform(k2, (hidden_dim,), jnp.float32, -lim1, lim1)
    w2 = jax.random.uniform(k3, (1, hidden_dim), jnp.float32, -lim2, lim2)
    b2 = jax.random.uniform(k4, (1,), jnp.float32, -lim2, lim2)
    return w1, b1, w2, b2


if __name__ == "__main__":
    key = jax.random.PRNGKey(0)
    kx, kp = jax.random.split(key)

    batch, state_dim, hidden_dim = 8, 4, 32
    x = jax.random.normal(kx, (batch, state_dim), jnp.float32)
    w1, b1, w2, b2 = init_params(kp, state_dim, hidden_dim)

    out = value_net_forward(x, w1, b1, w2, b2)
    out = jax.block_until_ready(out)

    # Pure-JAX reference (same semantics as the PyTorch forward).
    ref = jnp.maximum(x @ w1.T + b1, 0.0) @ w2.T + b2
    assert out.shape == (batch, 1)
    assert jnp.allclose(out, ref, atol=1e-5, rtol=1e-5)

    print("KERNEL_OK")
</pallas_src>

<mosaic_0001>
module attributes {stable_mosaic.version = 11 : i64} {
  func.func @_valuenet_kernel(%arg0: i32, %arg1: memref<4x128xf32, #tpu.memory_space<vmem>>, %arg2: memref<32x4xf32, #tpu.memory_space<vmem>>, %arg3: memref<32x1xf32, #tpu.memory_space<vmem>>, %arg4: memref<32x1xf32, #tpu.memory_space<vmem>>, %arg5: memref<1xf32, #tpu.memory_space<smem>>, %arg6: memref<1x128xf32, #tpu.memory_space<vmem>>) attributes {dimension_semantics = [#tpu.dimension_semantics<parallel>], iteration_bounds = array<i64: 1>, scalar_prefetch = 0 : i64, scratch_operands = 0 : i64, tpu.core_type = #tpu.core_type<tc>, window_params = [{transform_indices = @transform_0, window_bounds = array<i64: 4, 128>}, {pipeline_mode = #tpu.pipeline_mode<synchronous>, transform_indices = @transform_1, window_bounds = array<i64: 32, 4>}, {pipeline_mode = #tpu.pipeline_mode<synchronous>, transform_indices = @transform_2, window_bounds = array<i64: 32, 1>}, {pipeline_mode = #tpu.pipeline_mode<synchronous>, transform_indices = @transform_3, window_bounds = array<i64: 32, 1>}, {transform_indices = @transform_4, window_bounds = array<i64: 1>}, {transform_indices = @transform_5, window_bounds = array<i64: 1, 128>}]} {
    %c0 = arith.constant 0 : index
    %c0_0 = arith.constant 0 : index
    %0 = vector.load %arg1[%c0, %c0_0] : memref<4x128xf32, #tpu.memory_space<vmem>>, vector<4x128xf32>
    %c0_1 = arith.constant 0 : index
    %c0_2 = arith.constant 0 : index
    %1 = vector.load %arg2[%c0_1, %c0_2] : memref<32x4xf32, #tpu.memory_space<vmem>>, vector<32x4xf32>
    %c0_3 = arith.constant 0 : index
    %c0_4 = arith.constant 0 : index
    %2 = vector.load %arg3[%c0_3, %c0_4] : memref<32x1xf32, #tpu.memory_space<vmem>>, vector<32x1xf32>
    %c0_5 = arith.constant 0 : index
    %c0_6 = arith.constant 0 : index
    %3 = vector.load %arg4[%c0_5, %c0_6] : memref<32x1xf32, #tpu.memory_space<vmem>>, vector<32x1xf32>
    %c0_7 = arith.constant 0 : index
    %4 = memref.load %arg5[%c0_7] : memref<1xf32, #tpu.memory_space<smem>>
    %cst = arith.constant dense<0.000000e+00> : vector<32x128xf32>
    %5 = tpu.matmul %1, %0, %cst {dimension_numbers = #tpu.dot_dimension_numbers<[1], [0], [0], [1], [0, 0, 1, 1], [], []>} : vector<32x4xf32>, vector<4x128xf32>, vector<32x128xf32> -> vector<32x128xf32>
    %6 = vector.broadcast %2 : vector<32x1xf32> to vector<32x128xf32>
    %7 = arith.addf %5, %6 : vector<32x128xf32>
    %cst_8 = arith.constant 0.000000e+00 : f32
    %8 = vector.broadcast %cst_8 : f32 to vector<32x128xf32>
    %9 = arith.maximumf %7, %8 : vector<32x128xf32>
    %10 = vector.broadcast %3 : vector<32x1xf32> to vector<32x128xf32>
    %11 = arith.mulf %9, %10 : vector<32x128xf32>
    %cst_9 = arith.constant dense<0.000000e+00> : vector<128xf32>
    %12 = vector.multi_reduction <add>, %11, %cst_9 [0] : vector<32x128xf32> to vector<128xf32>
    %13 = vector.shape_cast %12 : vector<128xf32> to vector<1x128xf32>
    %14 = vector.broadcast %4 : f32 to vector<1x128xf32>
    %15 = arith.addf %13, %14 : vector<1x128xf32>
    %c0_10 = arith.constant 0 : index
    %c0_11 = arith.constant 0 : index
    %16 = vector.load %arg6[%c0_10, %c0_11] : memref<1x128xf32, #tpu.memory_space<vmem>>, vector<1x128xf32>
    tpu.vector_store %arg6[%c0_10, %c0_11], %15 {strides = array<i32>} : memref<1x128xf32, #tpu.memory_space<vmem>>, vector<1x128xf32>,
    return
  }
  func.func @transform_0(%arg0: i32) -> (i32, i32) {
    %c0_i32 = arith.constant 0 : i32
    %c0_i32_0 = arith.constant 0 : i32
    return %c0_i32, %arg0 : i32, i32
  }
  func.func @transform_1(%arg0: i32) -> (i32, i32) {
    %c0_i32 = arith.constant 0 : i32
    %c0_i32_0 = arith.constant 0 : i32
    %c0_i32_1 = arith.constant 0 : i32
    return %c0_i32, %c0_i32_0 : i32, i32
  }
  func.func @transform_2(%arg0: i32) -> (i32, i32) {
    %c0_i32 = arith.constant 0 : i32
    %c0_i32_0 = arith.constant 0 : i32
    %c0_i32_1 = arith.constant 0 : i32
    return %c0_i32, %c0_i32_0 : i32, i32
  }
  func.func @transform_3(%arg0: i32) -> (i32, i32) {
    %c0_i32 = arith.constant 0 : i32
    %c0_i32_0 = arith.constant 0 : i32
    %c0_i32_1 = arith.constant 0 : i32
    return %c0_i32, %c0_i32_0 : i32, i32
  }
  func.func @transform_4(%arg0: i32) -> i32 {
    %c0_i32 = arith.constant 0 : i32
    %c0_i32_0 = arith.constant 0 : i32
    return %c0_i32 : i32
  }
  func.func @transform_5(%arg0: i32) -> (i32, i32) {
    %c0_i32 = arith.constant 0 : i32
    %c0_i32_0 = arith.constant 0 : i32
    return %c0_i32, %arg0 : i32, i32
  }
}

</mosaic_0001>

<llo_original>
// kernel: tpu_custom_call.1
$region0: #{tpu_custom_call.1}
  #allocation0 [shape = 'u32[]', space=smem, size = 0x4, offset = 0x4, fixed_abs, tag = 'smem constant byte address 0x4 - core index']
  #allocation1 [shape = 'u32[144,128]{1,0:T(1,128)}', space=vmem, size = 0x12000, scoped, tag = 'internal scratch']
  #allocation2 [shape = 'f32[1]{0:T(128)S(6)}', space=smem, size = 0x200, scoped, tag = 'scoped memory for tpu_custom_call.1']
  %s0 = inlined_call_operand.vmem [shape: f32[4,128], index: 0, kind: input, shape index: {}]
  %s1 = inlined_call_operand.vmem [shape: f32[32,4], index: 1, kind: input, shape index: {}]
  %s2 = inlined_call_operand.vmem [shape: f32[32,1], index: 2, kind: input, shape index: {}]
  %s3 = inlined_call_operand.vmem [shape: f32[32,1], index: 3, kind: input, shape index: {}]
  %s4 = inlined_call_operand.<no memory space> [shape: f32[1], index: 4, kind: input, shape index: {}]
  %s5 = inlined_call_operand.hbm [shape: f32[1,128], index: 5, kind: output, shape index: {}]
  %s6 = sld [smem:[#allocation0]]
  $region30: #{tpu_custom_call.1} parent=0
    _
  %s8 = ssub.s32 1, %s6
  %s9 = scalar_select 0, %s8, %s6
  %10 = sst [smem:[#allocation2]] %s4
  $region1: #{tpu_custom_call.1} parent=0
    #allocation3 [shape = 'u8[512]{0}', space=vmem, size = 0x400, scoped, tag = 'output window, operand 0, single buffered']
    #allocation4 [shape = 's32[1]{0}', space=sflag, size = 0x4, scoped, tag = 'scoped memory for tpu_custom_call.1']
    %11 = vsyncpa [#allocation4], 0
    // Predicated region
    $region2: #{tpu_custom_call.1} parent=1 // pred_check
      _
    $region3: #{tpu_custom_call.1} parent=1 // pred_check_branch
      %13 = sbr.rel (0) target = $region5
    $region4: #{tpu_custom_call.1} parent=1 // pred_region
      _
    $region5: #{tpu_custom_call.1} parent=1 // pred_fallthru
      _
    // Predicated region
    $region6: #{tpu_custom_call.1} parent=1 // pred_check
      _
    $region7: #{tpu_custom_call.1} parent=1 // pred_check_branch
      %15 = sbr.rel (0) target = $region9
    $region8: #{tpu_custom_call.1} parent=1 // pred_region
      _
    $region9: #{tpu_custom_call.1} parent=1 // pred_fallthru
      _
    // Predicated region
    $region10: #{tpu_custom_call.1} parent=1 // pred_check
      _
    $region11: #{tpu_custom_call.1} parent=1 // pred_check_branch
      %17 = sbr.rel (0) target = $region13
    $region12: #{tpu_custom_call.1} parent=1 // pred_region
      _
    $region13: #{tpu_custom_call.1} parent=1 // pred_fallthru
      _
    // Predicated region
    $region14: #{tpu_custom_call.1} parent=1 // pred_check
      _
    $region15: #{tpu_custom_call.1} parent=1 // pred_check_branch
      %19 = sbr.rel (0) target = $region17
    $region16: #{tpu_custom_call.1} parent=1 // pred_region
      _
    $region17: #{tpu_custom_call.1} parent=1 // pred_fallthru
      _
    // Predicated region
    $region18: #{tpu_custom_call.1} parent=1 // pred_check
      _
    $region19: #{tpu_custom_call.1} parent=1 // pred_check_branch
      %21 = sbr.rel (0) target = $region21
    $region20: #{tpu_custom_call.1} parent=1 // pred_region
      _
    $region21: #{tpu_custom_call.1} parent=1 // pred_fallthru
      _
    %v22 = vld [vmem:[%s0] sm:$0xf]
    %v23 = vld [vmem:[%s1] sm:$0xff]
    %v24 = vld [vmem:[%s1 + $0x8] sm:$0xff]
    %v25 = vld [vmem:[%s1 + $0x10] sm:$0xff]
    %v26 = vld [vmem:[%s1 + $0x18] sm:$0xff]
    %v27 = vld [vmem:[%s2] sm:$0xff]
    %v28 = vld [vmem:[%s2 + $0x8] sm:$0xff]
    %v29 = vld [vmem:[%s2 + $0x10] sm:$0xff]
    %v30 = vld [vmem:[%s2 + $0x18] sm:$0xff]
    %v31 = vld [vmem:[%s3] sm:$0xff]
    %v32 = vld [vmem:[%s3 + $0x8] sm:$0xff]
    %v33 = vld [vmem:[%s3 + $0x10] sm:$0xff]
    %v34 = vld [vmem:[%s3 + $0x18] sm:$0xff]
    %s35 = sld [smem:[#allocation2]]
    %37 = vset.pattern.permute.xlu0 0
    %38 = vperm.xlu0 %37, %v27
    %v39 = vpop.permute.xlu0 %38
    %42 = vset.pattern.permute.xlu0 0
    %43 = vperm.xlu0 %42, %v28
    %v44 = vpop.permute.xlu0 %43
    %47 = vset.pattern.permute.xlu0 0
    %48 = vperm.xlu0 %47, %v29
    %v49 = vpop.permute.xlu0 %48
    %52 = vset.pattern.permute.xlu0 0
    %53 = vperm.xlu0 %52, %v30
    %v54 = vpop.permute.xlu0 %53
    %vm56 = vcmask 31744
    %v58 = vsel %vm56, %v23, 0
    %v61 = vsel %vm56, %v24, 0
    %v64 = vsel %vm56, %v25, 0
    %v67 = vsel %vm56, %v26, 0
    %vm69 = vcmask 1043456
    %v71 = vsel %vm69, %v22, 0
    %73 = vmatprep.subr.mxu0 0.0
    %74 = vmatpush1.msra.mxu0 %v71
    %75 = vmatprep.subr.mxu0 0.0
    %76 = vmatpush1.msra.mxu0 0.0
    %77 = vmatprep.subr.mxu0 0.0
    %78 = vmatpush1.msra.mxu0 0.0
    %79 = vmatprep.subr.mxu0 0.0
    %80 = vmatpush1.msra.mxu0 0.0
    %81 = vmatprep.subr.mxu0 0.0
    %82 = vmatpush1.msra.mxu0 0.0
    %83 = vmatprep.subr.mxu0 0.0
    %84 = vmatpush1.msra.mxu0 0.0
    %85 = vmatprep.subr.mxu0 0.0
    %86 = vmatpush1.msra.mxu0 0.0
    %87 = vmatprep.subr.mxu0 0.0
    %88 = vmatpush1.msra.mxu0 0.0
    %89 = vmatprep.subr.mxu0 0.0
    %90 = vmatpush1.msra.mxu0 0.0
    %91 = vmatprep.subr.mxu0 0.0
    %92 = vmatpush1.msra.mxu0 0.0
    %93 = vmatprep.subr.mxu0 0.0
    %94 = vmatpush1.msra.mxu0 0.0
    %95 = vmatprep.subr.mxu0 0.0
    %96 = vmatpush1.msra.mxu0 0.0
    %97 = vmatprep.subr.mxu0 0.0
    %98 = vmatpush1.msra.mxu0 0.0
    %99 = vmatprep.subr.mxu0 0.0
    %100 = vmatpush1.msra.mxu0 0.0
    %101 = vmatprep.subr.mxu0 0.0
    %102 = vmatpush1.msra.mxu0 0.0
    %103 = vmatprep.subr.mxu0 0.0
    %104 = vmatpush1.msra.mxu0 0.0
    %105 = vmatprep.subr.mxu0 0.0
    %106 = vmatpush1.msra.mxu0 0.0
    %107 = vmatprep.subr.mxu0 0.0
    %108 = vmatpush1.msra.mxu0 0.0
    %109 = vmatprep.subr.mxu0 0.0
    %110 = vmatpush1.msra.mxu0 0.0
    %111 = vmatprep.subr.mxu0 0.0
    %112 = vmatpush1.msra.mxu0 0.0
    %113 = vmatprep.subr.mxu0 0.0
    %114 = vmatpush1.msra.mxu0 0.0
    %115 = vmatprep.subr.mxu0 0.0
    %116 = vmatpush1.msra.mxu0 0.0
    %117 = vmatprep.subr.mxu0 0.0
    %118 = vmatpush1.msra.mxu0 0.0
    %119 = vmatprep.subr.mxu0 0.0
    %120 = vmatpush1.msra.mxu0 0.0
    %121 = vmatprep.subr.mxu0 0.0
    %122 = vmatpush1.msra.mxu0 0.0
    %123 = vmatprep.subr.mxu0 0.0
    %124 = vmatpush1.msra.mxu0 0.0
    %125 = vmatprep.subr.mxu0 0.0
    %126 = vmatpush1.msra.mxu0 0.0
    %127 = vmatprep.subr.mxu0 0.0
    %128 = vmatpush1.msra.mxu0 0.0
    %129 = vmatprep.subr.mxu0 0.0
    %130 = vmatpush1.msra.mxu0 0.0
    %131 = vmatprep.subr.mxu0 0.0
    %132 = vmatpush1.msra.mxu0 0.0
    %133 = vmatprep.subr.mxu0 0.0
    %134 = vmatpush1.msra.mxu0 0.0
    %135 = vmatprep.subr.mxu0 0.0
    %136 = vmatpush1.msra.mxu0 0.0
    %137 = vmatprep.mubr.f32.mxu0 0.0
    %138 = vmatmul.mubr.f32.gmra.mrb[0].mxu0 %v58
    %v139 = vpop.f32.mrb[0].mxu0
    %v140 = vadd.f32 %v39, %v139
    %v141 = vpop.f32.mrb[0].mxu0
    %142 = vmatprep.mubr.f32.mxu0 0.0
    %143 = vmatmul.mubr.f32.gmra.mrb[0].mxu0 %v61
    %v144 = vpop.f32.mrb[0].mxu0
    %v145 = vadd.f32 %v44, %v144
    %v146 = vpop.f32.mrb[0].mxu0
    %147 = vmatprep.mubr.f32.mxu0 0.0
    %148 = vmatmul.mubr.f32.gmra.mrb[0].mxu0 %v64
    %v149 = vpop.f32.mrb[0].mxu0
    %v150 = vadd.f32 %v49, %v149
    %v151 = vpop.f32.mrb[0].mxu0
    %152 = vmatprep.mubr.f32.mxu0 0.0
    %153 = vmatmul.mubr.f32.gmra.mrb[0].mxu0 %v67
    %v154 = vpop.f32.mrb[0].mxu0
    %v155 = vadd.f32 %v54, %v154
    %v156 = vpop.f32.mrb[0].mxu0
    %157 = vdwg.mxu0
    %v158 = vmax.f32 %v140, 0.0
    %v159 = vmax.f32 %v145, 0.0
    %v160 = vmax.f32 %v150, 0.0
    %v161 = vmax.f32 %v155, 0.0
    %163 = vset.pattern.permute.xlu0 0
    %164 = vperm.xlu0 %163, %v31
    %v165 = vpop.permute.xlu0 %164
    %168 = vset.pattern.permute.xlu0 0
    %169 = vperm.xlu0 %168, %v32
    %v170 = vpop.permute.xlu0 %169
    %173 = vset.pattern.permute.xlu0 0
    %174 = vperm.xlu0 %173, %v33
    %v175 = vpop.permute.xlu0 %174
    %178 = vset.pattern.permute.xlu0 0
    %179 = vperm.xlu0 %178, %v34
    %v180 = vpop.permute.xlu0 %179
    %v182 = vmul.f32 %v158, %v165
    %v183 = vmul.f32 %v159, %v170
    %v184 = vmul.f32 %v160, %v175
    %v185 = vmul.f32 %v161, %v180
    %v186 = vadd.f32 %v182, %v183
    %v187 = vadd.f32 %v186, %v184
    %v188 = vadd.f32 %v187, %v185
    %v189 = vrot.slane %v188, 4
    %v190 = vadd.f32 %v188, %v189
    %v191 = vrot.slane %v190, 2
    %v192 = vadd.f32 %v190, %v191
    %v193 = vrot.slane %v192, 1
    %v194 = vadd.f32 %v192, %v193
    %v195 = vstv %s35
    %v196 = vadd.f32 %v194, %v195
    %197 = vst [vmem:[#allocation3] sm:$0x1] %v196
    // Predicated region
    $region22: #{tpu_custom_call.1} parent=1 // pred_check
      _
    $region23: #{tpu_custom_call.1} parent=1 // pred_check_branch
      %199 = sbr.rel (0) target = $region25
    $region24: #{tpu_custom_call.1} parent=1 // pred_region
      %s201 = ssub.s32 16, 16
      %202 = vsyncadd [#allocation4], %s201
      %s204 = sshll.u32 [#allocation3], 4
      %s205 = int_to_ptr.vmem [resolvable:$true] %s204
      %207 = dma.vmem_to_hbm [thread:$0]  %s205, 16, %s5, [#allocation4]
    $region25: #{tpu_custom_call.1} parent=1 // pred_fallthru
      _
    // Predicated region
    $region26: #{tpu_custom_call.1} parent=1 // pred_check
      _
    $region27: #{tpu_custom_call.1} parent=1 // pred_check_branch
      %209 = sbr.rel (0) target = $region29
    $region28: #{tpu_custom_call.1} parent=1 // pred_region
      %210 = dma.done [#allocation4], 16
    $region29: #{tpu_custom_call.1} parent=1 // pred_fallthru
      _
    %211 = vsyncpa [#allocation4], 1

</llo_original>
